<compile_context>
chip_gen: v5e
topology: v5e:2x2
jax: 0.10.0
libtpu: 0.0.40
codegen_flags: <defaults>
</compile_context>

<pallas_src>
import functools

import jax
import jax.numpy as jnp
from jax import lax
from jax.experimental import pallas as pl
from jax.experimental.pallas import tpu as pltpu


# ---------------------------------------------------------------------------
# Small helpers
# ---------------------------------------------------------------------------
def _round_up(x, m):
    return ((x + m - 1) // m) * m


def _tpu_vmem_capacity_bytes():
    try:
        return int(pltpu.get_tpu_info().vmem_capacity_bytes)
    except Exception:
        return 128 * 1024 * 1024


def _pick_chunk_h(th, w, m_rows_cap):
    """Largest CH dividing th with CH * w <= m_rows_cap (>= 1)."""
    best = 1
    for c in range(1, th + 1):
        if th % c == 0 and c * w <= m_rows_cap:
            best = c
    return best


def _pick_tile_h(H, d, cap, est_fn, budget):
    """Largest TH <= cap with H % TH == 0, TH % d == 0 and est_fn(TH) <= budget.

    Falls back to the smallest valid TH if nothing fits the budget, and to
    TH = H (single tile, no halo needed) if no divisor of H is a multiple of d.
    """
    cands = [t for t in range(1, min(H, cap) + 1) if H % t == 0 and t % d == 0]
    if not cands:
        return H
    fitting = [t for t in cands if est_fn(t) <= budget]
    return max(fitting) if fitting else min(cands)


def _im2col_nhwc(x, d):
    """(N,H,W,C) -> (N,H,W,9C).  Channel block t = kx*3 + ky is x shifted by
    tap (ky, kx) with zero padding d (host-side; used for the small-cin layer)."""
    N, H, W, C = x.shape
    xz = jnp.pad(x, ((0, 0), (d, d), (d, d), (0, 0)))
    cols = [xz[:, ky * d:ky * d + H, kx * d:kx * d + W, :]
            for kx in range(3) for ky in range(3)]
    return jnp.concatenate(cols, axis=-1)


# ---------------------------------------------------------------------------
# Kernel
# ---------------------------------------------------------------------------
def _dc_block_kernel(*refs, th, wd, d, padl, nh, halo, fuse_cls, ch, pointwise):
    """3x3 dilated conv (+folded-BN bias, +ReLU) for one (batch, row-tile).

    Ref order: xc[, xu, xd], w, b[, cls_w, cls_b], out[, xpad(scratch)]
      xc    : (1, th, wd, cin_k)  bf16   current row tile (cin_k = 9*cin when
                                          pointwise, i.e. host-side im2col)
      xu/xd : (1, d,  wd, cin)    bf16   halo rows above / below (halo mode)
      w     : (G, Kg, cout)       bf16   K-packed per-kx weights (BN folded);
                                          G=3, Kg=3*cin (conv) or G=1, Kg=9*cin
      b     : (1, cout)           f32    folded BN bias
      cls_w : (cout, cpad)        bf16   1x1 cls weights, lane-padded
      cls_b : (1, cpad)           f32
      out   : (1, th, wd, cout|cpad)  bf16
      xpad  : (th+2d, padl+wd+d, cin) bf16  VMEM scratch (zero-padded window)
    """
    idx = 0
    xc_ref = refs[idx]; idx += 1
    if halo:
        xu_ref, xd_ref = refs[idx], refs[idx + 1]; idx += 2
    w_ref, b_ref = refs[idx], refs[idx + 1]; idx += 2
    if fuse_cls:
        cw_ref, cb_ref = refs[idx], refs[idx + 1]; idx += 2
    o_ref = refs[idx]; idx += 1
    xpad = refs[idx] if not pointwise else None

    if not pointwise:
        cin = xpad.shape[-1]
        # --- Assemble the zero-padded window: borders only (interior and halo
        #     rows are fully overwritten), all stores sublane-aligned. ---
        xpad[:, 0:padl, :] = jnp.zeros((th + 2 * d, padl, cin), xpad.dtype)
        xpad[:, padl + wd:, :] = jnp.zeros((th + 2 * d, d, cin), xpad.dtype)
        xpad[d:d + th, padl:padl + wd, :] = xc_ref[0]

        zrow = jnp.zeros((d, wd, cin), xpad.dtype)
        if halo:
            i = pl.program_id(1)

            @pl.when(i == 0)
            def _():
                xpad[0:d, padl:padl + wd, :] = zrow

            @pl.when(i > 0)
            def _():
                xpad[0:d, padl:padl + wd, :] = xu_ref[0]

            @pl.when(i == nh - 1)
            def _():
                xpad[th + d:, padl:padl + wd, :] = zrow

            @pl.when(i < nh - 1)
            def _():
                xpad[th + d:, padl:padl + wd, :] = xd_ref[0]
        else:
            xpad[0:d, padl:padl + wd, :] = zrow
            xpad[th + d:, padl:padl + wd, :] = zrow

    # --- Chunked, K-packed matmuls + epilogue (small live accumulator). ---
    m = ch * wd
    for c in range(th // ch):
        r0 = c * ch
        if pointwise:
            kg = xc_ref.shape[-1]
            patch = xc_ref[0, r0:r0 + ch].reshape(m, kg)
            acc = jnp.dot(patch, w_ref[0], preferred_element_type=jnp.float32)
        else:
            acc = None
            for kx in range(3):
                c0 = padl + (kx - 1) * d
                xs = xpad[r0:r0 + ch + 2 * d, c0:c0 + wd, :]   # (ch+2d, wd, cin)
                patch = jnp.concatenate(
                    [xs[ky * d:ky * d + ch].reshape(m, cin) for ky in range(3)],
                    axis=-1)                                   # (m, 3*cin)
                part = jnp.dot(patch, w_ref[kx],
                               preferred_element_type=jnp.float32)
                acc = part if acc is None else acc + part

        y = jnp.maximum(acc + b_ref[...], 0.0)                 # folded-BN bias + ReLU
        if fuse_cls:
            y = jnp.dot(y.astype(jnp.bfloat16), cw_ref[...],
                        preferred_element_type=jnp.float32) + cb_ref[...]
        o_ref[0, r0:r0 + ch, :, :] = y.reshape(ch, wd, -1).astype(o_ref.dtype)


# ---------------------------------------------------------------------------
# Wrapper
# ---------------------------------------------------------------------------
def dilated_conv_block(x, w9, bias, dilation, *, cls_w=None, cls_b=None,
                       tile_h_cap=256, m_rows_cap=1024):
    """x: (N,H,W,cin) NHWC; w9: (9,cin,cout) BN-folded (tap = ky*3+kx);
    bias: (1,cout) f32.  When cls_w/cls_b are given, the 1x1 cls conv is fused
    into the epilogue and lane-padded bf16 logits are returned."""
    N, H, W, cin = x.shape
    cout = w9.shape[-1]
    d = int(dilation)
    fuse_cls = cls_w is not None
    pointwise = cin <= 16          # small-channel layer: host-side im2col

    # Pad W to a multiple of 8 so in-kernel reshapes / stores are lane-dense.
    Wp = _round_up(W, 8)
    if Wp != W:
        x = jnp.pad(x, ((0, 0), (0, 0), (0, Wp - W), (0, 0)))
    x = x.astype(jnp.bfloat16)

    # ---- K-packed weights ----
    if pointwise:
        x = _im2col_nhwc(x, d)                                   # (N,H,Wp,9*cin)
        w_packed = jnp.concatenate(
            [w9[ky * 3 + kx] for kx in range(3) for ky in range(3)],
            axis=0)[None]                                        # (1, 9*cin, cout)
    else:
        w_packed = jnp.stack(
            [jnp.concatenate([w9[ky * 3 + kx] for ky in range(3)], axis=0)
             for kx in range(3)])                                # (3, 3*cin, cout)
    w_packed = w_packed.astype(jnp.bfloat16)
    G, Kg, _ = w_packed.shape
    cin_k = x.shape[-1]

    outc = cls_w.shape[-1] if fuse_cls else cout
    out_dtype = jnp.bfloat16
    padl = _round_up(d, 8)                 # aligned left pad for xpad stores
    padw = padl + Wp + d

    # ---- generation-aware VMEM budget (v7x: 64 MiB, v5e/v6e: 128 MiB) ----
    cap = _tpu_vmem_capacity_bytes()
    budget = min(int(cap * 0.45), 64 * 1024 * 1024)
    limit = min(int(cap * 0.75), 100 * 1024 * 1024)

    def _estimate(th):
        chh = _pick_chunk_h(th, Wp, m_rows_cap)
        m = chh * Wp
        est = 2 * th * Wp * cin_k * 2            # input tile, double-buffered
        est += 2 * th * Wp * outc * 2            # output tile, double-buffered
        est += 2 * w_packed.size * 2             # weights
        if fuse_cls:
            est += 2 * (cls_w.size * 2 + cls_b.size * 4)
        est += m * Kg * 2                        # packed patch
        est += 2 * m * cout * 4                  # f32 acc + relu result
        est += 2 * m * outc * 2                  # epilogue / store staging
        if not pointwise:
            est += 4 * d * Wp * cin_k * 2        # halo blocks
            est += (th + 2 * d) * padw * cin_k * 2   # xpad scratch
            est += (chh + 2 * d) * Wp * cin_k * 2    # per-kx shifted slab
        return est

    TH = _pick_tile_h(H, 1 if pointwise else d, tile_h_cap, _estimate, budget)
    nH = H // TH
    halo = (not pointwise) and nH > 1
    CH = _pick_chunk_h(TH, Wp, m_rows_cap)

    # ---- operands / specs ----
    operands = [x]
    in_specs = [pl.BlockSpec((1, TH, Wp, cin_k), lambda n, i: (n, i, 0, 0))]
    if halo:
        r = TH // d                 # row tile measured in d-row halo blocks
        nb = H // d                 # number of d-row blocks along H
        operands += [x, x]
        in_specs += [
            pl.BlockSpec((1, d, Wp, cin_k),
                         lambda n, i: (n, jnp.maximum(i * r - 1, 0), 0, 0)),
            pl.BlockSpec((1, d, Wp, cin_k),
                         lambda n, i: (n, jnp.minimum((i + 1) * r, nb - 1), 0, 0)),
        ]
    operands += [w_packed, bias]
    in_specs += [
        pl.BlockSpec((G, Kg, cout), lambda n, i: (0, 0, 0)),
        pl.BlockSpec((1, cout), lambda n, i: (0, 0)),
    ]
    if fuse_cls:
        cpad = cls_w.shape[-1]
        operands += [cls_w.astype(jnp.bfloat16), cls_b]
        in_specs += [
            pl.BlockSpec((cout, cpad), lambda n, i: (0, 0)),
            pl.BlockSpec((1, cpad), lambda n, i: (0, 0)),
        ]

    scratch = [] if pointwise else [
        pltpu.VMEM((TH + 2 * d, padw, cin_k), jnp.bfloat16)]

    kernel = functools.partial(
        _dc_block_kernel, th=TH, wd=Wp, d=d, padl=padl, nh=nH, halo=halo,
        fuse_cls=fuse_cls, ch=CH, pointwise=pointwise)

    out = pl.pallas_call(
        kernel,
        out_shape=jax.ShapeDtypeStruct((N, H, Wp, outc), out_dtype),
        grid=(N, nH),
        in_specs=in_specs,
        out_specs=pl.BlockSpec((1, TH, Wp, outc), lambda n, i: (n, i, 0, 0)),
        scratch_shapes=scratch,
        compiler_params=pltpu.CompilerParams(
            dimension_semantics=("parallel", "parallel"),
            vmem_limit_bytes=limit),
    )(*operands)

    if Wp != W:
        out = out[:, :, :W, :]
    return out


# ---------------------------------------------------------------------------
# Context module (parameters + forward)
# ---------------------------------------------------------------------------
def init_context_params(key, inplane, classes):
    ch = [inplane, 128, 128, 128, 128, 128, 128, 128]
    dilations = [1, 1, 2, 4, 8, 16, 1]
    eps = 1e-5
    params = {"convs": [], "dilations": dilations, "classes": classes}
    for i in range(7):
        cin, cout = ch[i], ch[i + 1]
        key, k_w, k_g, k_b, k_m, k_v = jax.random.split(key, 6)
        # conv weight, stored as (9, Cin, Cout)  (tap = ky*3 + kx)
        w = jax.random.normal(k_w, (9, cin, cout), jnp.float32) * (1.0 / (9 * cin)) ** 0.5
        # BatchNorm (eval-mode fold)
        gamma = jax.random.uniform(k_g, (cout,), jnp.float32, 0.5, 1.5)
        beta = 0.1 * jax.random.normal(k_b, (cout,), jnp.float32)
        r_mean = 0.1 * jax.random.normal(k_m, (cout,), jnp.float32)
        r_var = jax.random.uniform(k_v, (cout,), jnp.float32, 0.5, 1.5)
        scale = gamma / jnp.sqrt(r_var + eps)
        bias = beta - r_mean * scale
        # Fold the BN scale into the conv weights -> kernel epilogue = bias+ReLU.
        w_folded = w * scale[None, None, :]
        params["convs"].append(dict(w=w_folded, bias=bias.reshape(1, cout)))
    key, k_w, k_b = jax.random.split(key, 3)
    params["cls_w"] = jax.random.normal(k_w, (ch[-1], classes), jnp.float32) * (1.0 / ch[-1]) ** 0.5
    params["cls_b"] = 0.1 * jax.random.normal(k_b, (1, classes), jnp.float32)
    return params


def context_forward(params, x, *, tile_h_cap=256, m_rows_cap=1024):
    """x: (N, H, W, inplane) NHWC.  Returns (out, None) like the torch module."""
    classes = params["classes"]
    cpad = _round_up(classes, 128)                 # lane-dense padded classes
    cls_w_p = jnp.zeros((params["cls_w"].shape[0], cpad), jnp.float32)
    cls_w_p = cls_w_p.at[:, :classes].set(params["cls_w"])
    cls_b_p = jnp.zeros((1, cpad), jnp.float32)
    cls_b_p = cls_b_p.at[:, :classes].set(params["cls_b"])

    out = x.astype(jnp.bfloat16)
    n_layers = len(params["convs"])
    for li, (layer, dil) in enumerate(zip(params["convs"], params["dilations"])):
        if li == n_layers - 1:
            out = dilated_conv_block(out, layer["w"], layer["bias"], dil,
                                     cls_w=cls_w_p, cls_b=cls_b_p,
                                     tile_h_cap=tile_h_cap, m_rows_cap=m_rows_cap)
        else:
            out = dilated_conv_block(out, layer["w"], layer["bias"], dil,
                                     tile_h_cap=tile_h_cap, m_rows_cap=m_rows_cap)
    return out[..., :classes], None


# ---------------------------------------------------------------------------
# Pure-JAX reference (mirrors the kernel's bf16 operand rounding)
# ---------------------------------------------------------------------------
def _bf16_round(a):
    return a.astype(jnp.bfloat16).astype(jnp.float32)


def context_forward_ref(params, x):
    out = _bf16_round(x)
    for layer, d in zip(params["convs"], params["dilations"]):
        cin, cout = layer["w"].shape[1], layer["w"].shape[2]
        w_hwio = _bf16_round(layer["w"]).reshape(3, 3, cin, cout)
        y = lax.conv_general_dilated(
            out, w_hwio, window_strides=(1, 1),
            padding=[(d, d), (d, d)], rhs_dilation=(d, d),
            dimension_numbers=("NHWC", "HWIO", "NHWC"),
            precision=lax.Precision.HIGHEST)
        out = _bf16_round(jnp.maximum(y + layer["bias"][0], 0.0))
    y = jnp.einsum("nhwc,ck->nhwk", out, _bf16_round(params["cls_w"]),
                   precision=lax.Precision.HIGHEST) + params["cls_b"][0]
    return y, None


# ---------------------------------------------------------------------------
if __name__ == "__main__":
    key = jax.random.PRNGKey(0)
    k_p, k_x = jax.random.split(key)

    inplane, classes = 4, 8
    N, H, W = 2, 32, 32

    params = init_context_params(k_p, inplane, classes)
    x = jax.random.normal(k_x, (N, H, W, inplane), jnp.float32)

    # tile_h_cap=16 -> two row tiles per image (halo path exercised);
    # m_rows_cap=256 -> two M-chunks per row tile (chunked matmul exercised).
    out, aux = context_forward(params, x, tile_h_cap=16, m_rows_cap=256)
    out = jax.block_until_ready(out)
    assert aux is None
    assert out.shape == (N, H, W, classes), out.shape

    ref, _ = context_forward_ref(params, x)
    ref = jax.block_until_ready(ref)
    out_f32 = out.astype(jnp.float32)
    max_err = float(jnp.max(jnp.abs(out_f32 - ref)))
    assert jnp.allclose(out_f32, ref, rtol=5e-2, atol=5e-2), max_err

    print("KERNEL_OK")
</pallas_src>

<mosaic_0001>
module attributes {stable_mosaic.version = 11 : i64} {
  func.func @_dc_block_kernel(%arg0: i32, %arg1: i32, %arg2: memref<1x16x32x36xbf16, #tpu.memory_space<vmem>>, %arg3: memref<1x36x128xbf16, #tpu.memory_space<vmem>>, %arg4: memref<1x128xf32, #tpu.memory_space<vmem>>, %arg5: memref<1x16x32x128xbf16, #tpu.memory_space<vmem>>) attributes {dimension_semantics = [#tpu.dimension_semantics<parallel>, #tpu.dimension_semantics<parallel>], iteration_bounds = array<i64: 2, 2>, scalar_prefetch = 0 : i64, scratch_operands = 0 : i64, tpu.core_type = #tpu.core_type<tc>, window_params = [{transform_indices = @transform_0, window_bounds = array<i64: 1, 16, 32, 36>}, {pipeline_mode = #tpu.pipeline_mode<synchronous>, transform_indices = @transform_1, window_bounds = array<i64: 1, 36, 128>}, {pipeline_mode = #tpu.pipeline_mode<synchronous>, transform_indices = @transform_2, window_bounds = array<i64: 1, 128>}, {transform_indices = @transform_3, window_bounds = array<i64: 1, 16, 32, 128>}]} {
    %c0 = arith.constant 0 : index
    %c0_0 = arith.constant 0 : index
    %c0_1 = arith.constant 0 : index
    %c0_2 = arith.constant 0 : index
    %0 = vector.load %arg2[%c0, %c0_0, %c0_1, %c0_2] : memref<1x16x32x36xbf16, #tpu.memory_space<vmem>>, vector<1x8x32x36xbf16>
    %1 = vector.shape_cast %0 : vector<1x8x32x36xbf16> to vector<8x32x36xbf16>
    %2 = vector.shape_cast %1 : vector<8x32x36xbf16> to vector<256x36xbf16>
    %c0_3 = arith.constant 0 : index
    %c0_4 = arith.constant 0 : index
    %c0_5 = arith.constant 0 : index
    %3 = vector.load %arg3[%c0_3, %c0_4, %c0_5] : memref<1x36x128xbf16, #tpu.memory_space<vmem>>, vector<1x36x128xbf16>
    %4 = vector.shape_cast %3 : vector<1x36x128xbf16> to vector<36x128xbf16>
    %cst = arith.constant dense<0.000000e+00> : vector<256x128xf32>
    %5 = tpu.matmul %2, %4, %cst {dimension_numbers = #tpu.dot_dimension_numbers<[1], [0], [0], [1], [0, 0, 1, 1], [], []>} : vector<256x36xbf16>, vector<36x128xbf16>, vector<256x128xf32> -> vector<256x128xf32>
    %c0_6 = arith.constant 0 : index
    %c0_7 = arith.constant 0 : index
    %6 = vector.load %arg4[%c0_6, %c0_7] : memref<1x128xf32, #tpu.memory_space<vmem>>, vector<1x128xf32>
    %7 = vector.broadcast %6 : vector<1x128xf32> to vector<256x128xf32>
    %8 = arith.addf %5, %7 : vector<256x128xf32>
    %cst_8 = arith.constant 0.000000e+00 : f32
    %9 = vector.broadcast %cst_8 : f32 to vector<256x128xf32>
    %10 = arith.maximumf %8, %9 : vector<256x128xf32>
    %11 = vector.shape_cast %10 : vector<256x128xf32> to vector<8x32x128xf32>
    %12 = arith.truncf %11 : vector<8x32x128xf32> to vector<8x32x128xbf16>
    %c0_9 = arith.constant 0 : index
    %c0_10 = arith.constant 0 : index
    %c0_11 = arith.constant 0 : index
    %c0_12 = arith.constant 0 : index
    %13 = vector.load %arg5[%c0_9, %c0_10, %c0_11, %c0_12] : memref<1x16x32x128xbf16, #tpu.memory_space<vmem>>, vector<1x8x32x128xbf16>
    %14 = vector.shape_cast %13 : vector<1x8x32x128xbf16> to vector<8x32x128xbf16>
    %15 = vector.shape_cast %12 : vector<8x32x128xbf16> to vector<1x8x32x128xbf16>
    tpu.vector_store %arg5[%c0_9, %c0_10, %c0_11, %c0_12], %15 {strides = array<i32>} : memref<1x16x32x128xbf16, #tpu.memory_space<vmem>>, vector<1x8x32x128xbf16>,
    %c0_13 = arith.constant 0 : index
    %c8 = arith.constant 8 : index
    %c0_14 = arith.constant 0 : index
    %c0_15 = arith.constant 0 : index
    %16 = vector.load %arg2[%c0_13, %c8, %c0_14, %c0_15] : memref<1x16x32x36xbf16, #tpu.memory_space<vmem>>, vector<1x8x32x36xbf16>
    %17 = vector.shape_cast %16 : vector<1x8x32x36xbf16> to vector<8x32x36xbf16>
    %18 = vector.shape_cast %17 : vector<8x32x36xbf16> to vector<256x36xbf16>
    %c0_16 = arith.constant 0 : index
    %c0_17 = arith.constant 0 : index
    %c0_18 = arith.constant 0 : index
    %19 = vector.load %arg3[%c0_16, %c0_17, %c0_18] : memref<1x36x128xbf16, #tpu.memory_space<vmem>>, vector<1x36x128xbf16>
    %20 = vector.shape_cast %19 : vector<1x36x128xbf16> to vector<36x128xbf16>
    %cst_19 = arith.constant dense<0.000000e+00> : vector<256x128xf32>
    %21 = tpu.matmul %18, %20, %cst_19 {dimension_numbers = #tpu.dot_dimension_numbers<[1], [0], [0], [1], [0, 0, 1, 1], [], []>} : vector<256x36xbf16>, vector<36x128xbf16>, vector<256x128xf32> -> vector<256x128xf32>
    %c0_20 = arith.constant 0 : index
    %c0_21 = arith.constant 0 : index
    %22 = vector.load %arg4[%c0_20, %c0_21] : memref<1x128xf32, #tpu.memory_space<vmem>>, vector<1x128xf32>
    %23 = vector.broadcast %22 : vector<1x128xf32> to vector<256x128xf32>
    %24 = arith.addf %21, %23 : vector<256x128xf32>
    %cst_22 = arith.constant 0.000000e+00 : f32
    %25 = vector.broadcast %cst_22 : f32 to vector<256x128xf32>
    %26 = arith.maximumf %24, %25 : vector<256x128xf32>
    %27 = vector.shape_cast %26 : vector<256x128xf32> to vector<8x32x128xf32>
    %28 = arith.truncf %27 : vector<8x32x128xf32> to vector<8x32x128xbf16>
    %c0_23 = arith.constant 0 : index
    %c8_24 = arith.constant 8 : index
    %c0_25 = arith.constant 0 : index
    %c0_26 = arith.constant 0 : index
    %29 = vector.load %arg5[%c0_23, %c8_24, %c0_25, %c0_26] : memref<1x16x32x128xbf16, #tpu.memory_space<vmem>>, vector<1x8x32x128xbf16>
    %30 = vector.shape_cast %29 : vector<1x8x32x128xbf16> to vector<8x32x128xbf16>
    %31 = vector.shape_cast %28 : vector<8x32x128xbf16> to vector<1x8x32x128xbf16>
    tpu.vector_store %arg5[%c0_23, %c8_24, %c0_25, %c0_26], %31 {strides = array<i32>} : memref<1x16x32x128xbf16, #tpu.memory_space<vmem>>, vector<1x8x32x128xbf16>,
    return
  }
  func.func @transform_0(%arg0: i32, %arg1: i32) -> (i32, i32, i32, i32) {
    %c0_i32 = arith.constant 0 : i32
    %c0_i32_0 = arith.constant 0 : i32
    %c0_i32_1 = arith.constant 0 : i32
    return %arg0, %arg1, %c0_i32, %c0_i32_0 : i32, i32, i32, i32
  }
  func.func @transform_1(%arg0: i32, %arg1: i32) -> (i32, i32, i32) {
    %c0_i32 = arith.constant 0 : i32
    %c0_i32_0 = arith.constant 0 : i32
    %c0_i32_1 = arith.constant 0 : i32
    %c0_i32_2 = arith.constant 0 : i32
    return %c0_i32, %c0_i32_0, %c0_i32_1 : i32, i32, i32
  }
  func.func @transform_2(%arg0: i32, %arg1: i32) -> (i32, i32) {
    %c0_i32 = arith.constant 0 : i32
    %c0_i32_0 = arith.constant 0 : i32
    %c0_i32_1 = arith.constant 0 : i32
    return %c0_i32, %c0_i32_0 : i32, i32
  }
  func.func @transform_3(%arg0: i32, %arg1: i32) -> (i32, i32, i32, i32) {
    %c0_i32 = arith.constant 0 : i32
    %c0_i32_0 = arith.constant 0 : i32
    %c0_i32_1 = arith.constant 0 : i32
    return %arg0, %arg1, %c0_i32, %c0_i32_0 : i32, i32, i32, i32
  }
}

</mosaic_0001>

<llo_original>
// kernel: tpu_custom_call.1
$region0: #{tpu_custom_call.1}
  #allocation0 [shape = 'u32[]', space=smem, size = 0x4, offset = 0x4, fixed_abs, tag = 'smem constant byte address 0x4 - core index']
  #allocation1 [shape = 'u32[72,128]{1,0:T(1,128)}', space=vmem, size = 0x9000, scoped, tag = 'internal scratch']
  %s0 = inlined_call_operand.hbm [shape: bf16[2,32,32,36], index: 0, kind: input, shape index: {}]
  %s1 = inlined_call_operand.hbm [shape: bf16[1,36,128], index: 1, kind: input, shape index: {}]
  %s2 = inlined_call_operand.vmem [shape: f32[1,128], index: 2, kind: input, shape index: {}]
  %s3 = inlined_call_operand.hbm [shape: bf16[2,32,32,128], index: 3, kind: output, shape index: {}]
  %s4 = sld [smem:[#allocation0]]
  $region53: #{tpu_custom_call.1} parent=0
    _
  %s6 = ssub.s32 1, %s4
  %s7 = scalar_select 0, %s6, %s4
  $region1: #{tpu_custom_call.1} parent=0
    #allocation2 [shape = 'u8[262144]{0}', space=vmem, size = 0x40000, scoped, tag = 'input window, operand 0']
    #allocation3 [shape = 's32[2]{0}', space=sflag, size = 0x8, scoped, tag = 'scoped memory for tpu_custom_call.1']
    #allocation4 [shape = 's32[2]{0}', space=sflag, size = 0x8, scoped, tag = 'scoped memory for tpu_custom_call.1']
    #allocation5 [shape = 'u8[10240]{0}', space=vmem, size = 0x2800, scoped, tag = 'input window, operand 1, single buffered']
    #allocation6 [shape = 's32[1]{0}', space=sflag, size = 0x4, scoped, tag = 'scoped memory for tpu_custom_call.1']
    #allocation7 [shape = 'u8[262144]{0}', space=vmem, size = 0x40000, scoped, tag = 'output window, operand 0']
    %8 = vsyncpa [#allocation3], 0
    %s9 = scalar_lea.sflag [#allocation3], 1
    %10 = vsyncpa %s9, 0
    %11 = vsyncpa [#allocation6], 0
    %12 = vsyncpa [#allocation4], 0
    %s13 = scalar_lea.sflag [#allocation4], 1
    %14 = vsyncpa %s13, 0
    loop: start=0, step=1, limit=6
    $region2: #{tpu_custom_call.1} parent=1 // loop_pre_header
      _
    $region3: #{tpu_custom_call.1} parent=1 // loop_header
      %s16 = sphi 0, %s20
      %p17 = scmp.ge.s32.totalorder %s16, 6
      %s23 = sphi 0, %s35
      %s24 = sphi 0, %s31
      %s25 = sphi 0, %s23
      %s26 = sphi 0, %s24
      %s27 = sphi 0, %s25
      %s28 = sphi 0, %s26
      %s40 = sphi 0, %s42
      %s43 = sphi 0, %s40
      %s44 = sphi 0, %s43
      %s60 = sphi 0, %s44
      %s64 = sphi 0, %s64
      %s66 = sphi 0, %s64
      %s67 = sphi 0, %s66
      %s81 = sphi 0, %s67
      %s85 = sphi 0, %s85
      %s87 = sphi 0, %s85
      %s88 = sphi 0, %s87
      %s102 = sphi 0, %s88
      %s110 = sphi 0, %s112
      %s113 = sphi 0, %s110
      %s114 = sphi 0, %s113
      %s130 = sphi 0, %s114
    $region4: #{tpu_custom_call.1} parent=1 // loop_header_branch
      %19 = sbr.rel (%p17) target = $region8
    $region5: #{tpu_custom_call.1} parent=1 // loop_body
      %s21 = ssub.s32 %s16, 1
      %s22 = ssub.s32 %s16, 2
      %s29 = sadd.s32 1, %s24
      %p30 = scmp.ge.s32.totalorder %s29, 2
      %s31 = scalar_select %p30, 0, %s29
      %s32 = sadd.s32 1, %s23
      %s33 = scalar_select %p30, %s32, %s23
      %p34 = scmp.ge.s32.totalorder %s33, 2
      %s35 = scalar_select %p34, 0, %s33
      %s36 = ssub.s32 %s23, %s35
      %s37 = ssub.s32 %s24, %s31
      %s38 = sor.u32 %s36, %s37
      %p39 = scmp.eq.s32.totalorder %s38, 0
      %s41 = sadd.s32 %s40, 1
      %s42 = scalar_select %p39, %s40, %s41
      %p45 = pneg %p39
      %p46 = scmp.eq.s32.totalorder %s16, 3
      %p47 = por %p45, %p46
      %p48 = scmp.ne.s32.totalorder %s40, %s43
      %p49 = scmp.eq.s32.totalorder %s16, 0
      %p50 = por %p48, %p49
      %p51 = scmp.ne.s32.totalorder %s40, %s43
      %p52 = scmp.eq.s32.totalorder %s21, 3
      %p53 = por %p51, %p52
      %p54 = scmp.ne.s32.totalorder %s43, %s44
      %p55 = scmp.eq.s32.totalorder %s21, 0
      %p56 = por %p54, %p55
      %p57 = scmp.ne.s32.totalorder %s43, %s44
      %p58 = scmp.eq.s32.totalorder %s22, 3
      %p59 = por %p57, %p58
      %p61 = scmp.ne.s32.totalorder %s44, %s60
      %p62 = scmp.eq.s32.totalorder %s22, 0
      %p63 = por %p61, %p62
      %s65 = sadd.s32 %s64, 1
      %p68 = scmp.eq.s32.totalorder %s16, 3
      %p69 = scmp.ne.s32.totalorder %s64, %s66
      %p70 = scmp.eq.s32.totalorder %s16, 0
      %p71 = por %p69, %p70
      %p72 = scmp.ne.s32.totalorder %s64, %s66
      %p73 = scmp.eq.s32.totalorder %s21, 3
      %p74 = por %p72, %p73
      %p75 = scmp.ne.s32.totalorder %s66, %s67
      %p76 = scmp.eq.s32.totalorder %s21, 0
      %p77 = por %p75, %p76
      %p78 = scmp.ne.s32.totalorder %s66, %s67
      %p79 = scmp.eq.s32.totalorder %s22, 3
      %p80 = por %p78, %p79
      %p82 = scmp.ne.s32.totalorder %s67, %s81
      %p83 = scmp.eq.s32.totalorder %s22, 0
      %p84 = por %p82, %p83
      %s86 = sadd.s32 %s85, 1
      %p89 = scmp.eq.s32.totalorder %s16, 3
      %p90 = scmp.ne.s32.totalorder %s85, %s87
      %p91 = scmp.eq.s32.totalorder %s16, 0
      %p92 = por %p90, %p91
      %p93 = scmp.ne.s32.totalorder %s85, %s87
      %p94 = scmp.eq.s32.totalorder %s21, 3
      %p95 = por %p93, %p94
      %p96 = scmp.ne.s32.totalorder %s87, %s88
      %p97 = scmp.eq.s32.totalorder %s21, 0
      %p98 = por %p96, %p97
      %p99 = scmp.ne.s32.totalorder %s87, %s88
      %p100 = scmp.eq.s32.totalorder %s22, 3
      %p101 = por %p99, %p100
      %p103 = scmp.ne.s32.totalorder %s88, %s102
      %p104 = scmp.eq.s32.totalorder %s22, 0
      %p105 = por %p103, %p104
      %s106 = ssub.s32 %s23, %s35
      %s107 = ssub.s32 %s24, %s31
      %s108 = sor.u32 %s106, %s107
      %p109 = scmp.eq.s32.totalorder %s108, 0
      %s111 = sadd.s32 %s110, 1
      %s112 = scalar_select %p109, %s110, %s111
      %p115 = pneg %p109
      %p116 = scmp.eq.s32.totalorder %s16, 3
      %p117 = por %p115, %p116
      %p118 = scmp.ne.s32.totalorder %s110, %s113
      %p119 = scmp.eq.s32.totalorder %s16, 0
      %p120 = por %p118, %p119
      %p121 = scmp.ne.s32.totalorder %s110, %s113
      %p122 = scmp.eq.s32.totalorder %s21, 3
      %p123 = por %p121, %p122
      %p124 = scmp.ne.s32.totalorder %s113, %s114
      %p125 = scmp.eq.s32.totalorder %s21, 0
      %p126 = por %p124, %p125
      %p127 = scmp.ne.s32.totalorder %s113, %s114
      %p128 = scmp.eq.s32.totalorder %s22, 3
      %p129 = por %p127, %p128
      %p131 = scmp.ne.s32.totalorder %s114, %s130
      %p132 = scmp.eq.s32.totalorder %s22, 0
      %p133 = por %p131, %p132
      %p134 = scmp.le.s32.totalorder 1, %s16
      %p135 = scmp.lt.s32.totalorder %s16, 5
      %p136 = pnand %p134, %p135
      %p137 = pneg %p136
      // Predicated region
      $region9: #{tpu_custom_call.1} parent=5 // pred_check
        _
      $region10: #{tpu_custom_call.1} parent=5 // pred_check_branch
        %139 = sbr.rel (%p136) target = $region12
      $region11: #{tpu_custom_call.1} parent=5 // pred_region
        %s140 = ssub.s32 %s16, 1
        // Predicated region
        $region13: #{tpu_custom_call.1} parent=11 // pred_check
          %p141 = pneg %p77
        $region14: #{tpu_custom_call.1} parent=11 // pred_check_branch
          %143 = sbr.rel (%p141) target = $region16
        $region15: #{tpu_custom_call.1} parent=11 // pred_region
          %145 = vsyncadd [#allocation6], 0
          %s146 = sshll.u32 %s1, 4
          %s147 = int_to_ptr.hbm [resolvable:$true] %s146
          %s148 = sshll.u32 [#allocation5], 4
          %s149 = int_to_ptr.vmem [resolvable:$true] %s148
          %154 = dma.hbm_to_vmem [thread:$0]  %s147, 320, %s149, [#allocation6], 64, 64, 4
        $region16: #{tpu_custom_call.1} parent=11 // pred_fallthru
          _
        // Predicated region
        $region17: #{tpu_custom_call.1} parent=11 // pred_check
          %p155 = pneg %p98
        $region18: #{tpu_custom_call.1} parent=11 // pred_check_branch
          %157 = sbr.rel (%p155) target = $region20
        $region19: #{tpu_custom_call.1} parent=11 // pred_region
          _
        $region20: #{tpu_custom_call.1} parent=11 // pred_fallthru
          _
      $region12: #{tpu_custom_call.1} parent=5 // pred_fallthru
        _
      %p158 = scmp.lt.s32.totalorder %s16, 4
      // Predicated region
      $region21: #{tpu_custom_call.1} parent=5 // pred_check
        %p159 = pneg %p158
      $region22: #{tpu_custom_call.1} parent=5 // pred_check_branch
        %161 = sbr.rel (%p159) target = $region24
      $region23: #{tpu_custom_call.1} parent=5 // pred_region
        // Predicated region
        $region25: #{tpu_custom_call.1} parent=23 // pred_check
          %p162 = pneg %p50
        $region26: #{tpu_custom_call.1} parent=23 // pred_check_branch
          %164 = sbr.rel (%p162) target = $region28
        $region27: #{tpu_custom_call.1} parent=23 // pred_region
          %s165 = sand.u32 %s40, 1
          %s166 = scalar_lea.sflag [#allocation3], %s165
          %s167 = sand.u32 %s40, 1
          %s168 = smul.addr %s167, 256
          %s169 = scalar_lea.vmem [#allocation2], %s168
          %s170 = smul.u32 16, %s24
          %172 = vsyncadd %s166, 0
          %s173 = smul.addr %s170, 4
          %s174 = smul.addr %s23, 128
          %s175 = sadd.s32 %s173, %s174
          %s176 = smul.addr %s175, 4
          %s177 = scalar_lea.hbm %s0, %s176
          %s178 = sshll.u32 %s177, 4
          %s179 = int_to_ptr.hbm [resolvable:$true] %s178
          %s180 = sshll.u32 %s169, 4
          %s181 = int_to_ptr.vmem [resolvable:$true] %s180
          %186 = dma.hbm_to_vmem [thread:$0]  %s179, 4096, %s181, %s166, 64, 64, 4
        $region28: #{tpu_custom_call.1} parent=23 // pred_fallthru
          _
      $region24: #{tpu_custom_call.1} parent=5 // pred_fallthru
        _
      %p187 = scmp.le.s32.totalorder 1, %s16
      %p188 = scmp.lt.s32.totalorder %s16, 5
      %p189 = pnand %p187, %p188
      %p190 = pneg %p189
      // Predicated region
      $region29: #{tpu_custom_call.1} parent=5 // pred_check
        _
      $region30: #{tpu_custom_call.1} parent=5 // pred_check_branch
        %192 = sbr.rel (%p189) target = $region32
      $region31: #{tpu_custom_call.1} parent=5 // pred_region
        %s193 = ssub.s32 %s16, 1
        %s194 = sand.u32 %s43, 1
        %s195 = scalar_lea.sflag [#allocation3], %s194
        %s196 = sand.u32 %s43, 1
        %s197 = smul.addr %s196, 256
        %s198 = scalar_lea.vmem [#allocation2], %s197
        // Predicated region
        $region33: #{tpu_custom_call.1} parent=31 // pred_check
          %p199 = pneg %p56
        $region34: #{tpu_custom_call.1} parent=31 // pred_check_branch
          %201 = sbr.rel (%p199) target = $region36
        $region35: #{tpu_custom_call.1} parent=31 // pred_region
          %203 = dma.done %s195, 4096
        $region36: #{tpu_custom_call.1} parent=31 // pred_fallthru
          _
        // Predicated region
        $region37: #{tpu_custom_call.1} parent=31 // pred_check
          %p204 = pneg %p77
        $region38: #{tpu_custom_call.1} parent=31 // pred_check_branch
          %206 = sbr.rel (%p204) target = $region40
        $region39: #{tpu_custom_call.1} parent=31 // pred_region
          %208 = dma.done [#allocation6], 320
        $region40: #{tpu_custom_call.1} parent=31 // pred_fallthru
          _
        %s209 = sand.u32 %s43, 1
        %s210 = scalar_lea.sflag [#allocation3], %s209
        %s211 = sand.u32 %s43, 1
        %s212 = smul.addr %s211, 256
        %s213 = scalar_lea.vmem [#allocation2], %s212
        %p214 = pneg %p56
        %p215 = pneg %p53
        %p216 = pneg %p77
        %p217 = pneg %p74
        %p218 = pneg %p98
        %p219 = pneg %p95
        %p220 = pneg %p126
        %p221 = pneg %p123
        %s222 = sand.u32 %s113, 1
        %s223 = scalar_lea.sflag [#allocation4], %s222
        %s224 = sand.u32 %s113, 1
        %s225 = smul.addr %s224, 256
        %s226 = scalar_lea.vmem [#allocation7], %s225
        %s227 = smul.u32 16, %s26
        %s228 = smul.u32 16, %s26
        %v230 = vld [vmem:[%s198] sm:$0xf]
        %v231 = vld [vmem:[%s198 + $0x4] sm:$0xf]
        %v232 = vld [vmem:[%s198 + $0x8] sm:$0xf]
        %v233 = vld [vmem:[%s198 + $0xc] sm:$0xf]
        %v234 = vld [vmem:[%s198 + $0x10] sm:$0xf]
        %v235 = vld [vmem:[%s198 + $0x14] sm:$0xf]
        %v236 = vld [vmem:[%s198 + $0x18] sm:$0xf]
        %v237 = vld [vmem:[%s198 + $0x1c] sm:$0xf]
        %v238 = vld [vmem:[%s198 + $0x20] sm:$0xf]
        %v239 = vld [vmem:[%s198 + $0x24] sm:$0xf]
        %v240 = vld [vmem:[%s198 + $0x28] sm:$0xf]
        %v241 = vld [vmem:[%s198 + $0x2c] sm:$0xf]
        %v242 = vld [vmem:[%s198 + $0x30] sm:$0xf]
        %v243 = vld [vmem:[%s198 + $0x34] sm:$0xf]
        %v244 = vld [vmem:[%s198 + $0x38] sm:$0xf]
        %v245 = vld [vmem:[%s198 + $0x3c] sm:$0xf]
        %v246 = vld [vmem:[%s198 + $0x40] sm:$0xf]
        %v247 = vld [vmem:[%s198 + $0x44] sm:$0xf]
        %v248 = vld [vmem:[%s198 + $0x48] sm:$0xf]
        %v249 = vld [vmem:[%s198 + $0x4c] sm:$0xf]
        %v250 = vld [vmem:[%s198 + $0x50] sm:$0xf]
        %v251 = vld [vmem:[%s198 + $0x54] sm:$0xf]
        %v252 = vld [vmem:[%s198 + $0x58] sm:$0xf]
        %v253 = vld [vmem:[%s198 + $0x5c] sm:$0xf]
        %v254 = vld [vmem:[%s198 + $0x60] sm:$0xf]
        %v255 = vld [vmem:[%s198 + $0x64] sm:$0xf]
        %v256 = vld [vmem:[%s198 + $0x68] sm:$0xf]
        %v257 = vld [vmem:[%s198 + $0x6c] sm:$0xf]
        %v258 = vld [vmem:[%s198 + $0x70] sm:$0xf]
        %v259 = vld [vmem:[%s198 + $0x74] sm:$0xf]
        %v260 = vld [vmem:[%s198 + $0x78] sm:$0xf]
        %v261 = vld [vmem:[%s198 + $0x7c] sm:$0xf]
        %v262 = vld [vmem:[#allocation5] sm:$0xf]
        %v263 = vld [vmem:[#allocation5 + $0x4] sm:$0xf]
        %v264 = vld [vmem:[#allocation5 + $0x8] sm:$0xf]
        %v265 = vld [vmem:[#allocation5 + $0xc] sm:$0xf]
        %v266 = vld [vmem:[#allocation5 + $0x10] sm:$0x3]
        %v267 = vld [vmem:[%s2] sm:$0x1]
        %v269 = vperm.slane %v267, 0
        %v303 = vunpack.c.l.b16 %v230
        %v304 = vunpack.c.l.b16 %v231
        %v305 = vunpack.c.l.b16 %v232
        %v306 = vunpack.c.l.b16 %v233
        %v307 = vunpack.c.l.b16 %v234
        %v308 = vunpack.c.l.b16 %v235
        %v309 = vunpack.c.l.b16 %v236
        %v310 = vunpack.c.l.b16 %v237
        %v311 = vunpack.c.l.b16 %v238
        %v312 = vunpack.c.l.b16 %v239
        %v313 = vunpack.c.l.b16 %v240
        %v314 = vunpack.c.l.b16 %v241
        %v315 = vunpack.c.l.b16 %v242
        %v316 = vunpack.c.l.b16 %v243
        %v317 = vunpack.c.l.b16 %v244
        %v318 = vunpack.c.l.b16 %v245
        %v319 = vunpack.c.l.b16 %v246
        %v320 = vunpack.c.l.b16 %v247
        %v321 = vunpack.c.l.b16 %v248
        %v322 = vunpack.c.l.b16 %v249
        %v323 = vunpack.c.l.b16 %v250
        %v324 = vunpack.c.l.b16 %v251
        %v325 = vunpack.c.l.b16 %v252
        %v326 = vunpack.c.l.b16 %v253
        %v327 = vunpack.c.l.b16 %v254
        %v328 = vunpack.c.l.b16 %v255
        %v329 = vunpack.c.l.b16 %v256
        %v330 = vunpack.c.l.b16 %v257
        %v331 = vunpack.c.l.b16 %v258
        %v332 = vunpack.c.l.b16 %v259
        %v333 = vunpack.c.l.b16 %v260
        %v334 = vunpack.c.l.b16 %v261
        %v335 = vpack.c.b16 %v304, %v303
        %v336 = vpack.c.b16 %v306, %v305
        %v337 = vpack.c.b16 %v308, %v307
        %v338 = vpack.c.b16 %v310, %v309
        %v339 = vpack.c.b16 %v312, %v311
        %v340 = vpack.c.b16 %v314, %v313
        %v341 = vpack.c.b16 %v316, %v315
        %v342 = vpack.c.b16 %v318, %v317
        %v343 = vpack.c.b16 %v320, %v319
        %v344 = vpack.c.b16 %v322, %v321
        %v345 = vpack.c.b16 %v324, %v323
        %v346 = vpack.c.b16 %v326, %v325
        %v347 = vpack.c.b16 %v328, %v327
        %v348 = vpack.c.b16 %v330, %v329
        %v349 = vpack.c.b16 %v332, %v331
        %v350 = vpack.c.b16 %v334, %v333
        %v356 = vunpack.c.l.b16 %v262
        %v357 = vunpack.c.l.b16 %v263
        %v358 = vunpack.c.l.b16 %v264
        %v359 = vunpack.c.l.b16 %v265
        %v360 = vunpack.c.l.b16 %v266
        %v361 = vpack.c.b16 %v357, %v356
        %v362 = vpack.c.b16 %v359, %v358
        %v363 = vpack.c.b16 %v360, %v360
        %vm366 = vcmask 293888
        %v368 = vsel %vm366, %v335, 0
        %v371 = vsel %vm366, %v336, 0
        %v374 = vsel %vm366, %v337, 0
        %v377 = vsel %vm366, %v338, 0
        %v380 = vsel %vm366, %v339, 0
        %v383 = vsel %vm366, %v340, 0
        %v386 = vsel %vm366, %v341, 0
        %v389 = vsel %vm366, %v342, 0
        %v392 = vsel %vm366, %v343, 0
        %v395 = vsel %vm366, %v344, 0
        %v398 = vsel %vm366, %v345, 0
        %v401 = vsel %vm366, %v346, 0
        %v404 = vsel %vm366, %v347, 0
        %v407 = vsel %vm366, %v348, 0
        %v410 = vsel %vm366, %v349, 0
        %v413 = vsel %vm366, %v350, 0
        %vm415 = vcmask 1041408
        %v417 = vsel %vm415, %v363, 0
        %419 = vmatpush.bf16.msra.mxu0 0
        %420 = vmatpush.bf16.msra.mxu0 0
        %421 = vmatpush.bf16.msra.mxu0 0
        %422 = vmatpush.bf16.msra.mxu0 0
        %423 = vmatpush.bf16.msra.mxu0 0
        %424 = vmatpush.bf16.msra.mxu0 %v417
        %425 = vmatpush.bf16.msra.mxu0 %v362
        %426 = vmatpush.bf16.msra.mxu0 %v361
        %427 = vmatmul.bf16.gmra.mxu0 %v368
        %v428 = vpop.f32.mrf.mxu0
        %v429 = vadd.f32 %v269, %v428
        %v430 = vpop.f32.mrf.mxu0
        %v431 = vadd.f32 %v269, %v430
        %432 = vmatmul.bf16.gmra.mxu0 %v371
        %v433 = vpop.f32.mrf.mxu0
        %v434 = vadd.f32 %v269, %v433
        %v435 = vpop.f32.mrf.mxu0
        %v436 = vadd.f32 %v269, %v435
        %437 = vmatmul.bf16.gmra.mxu0 %v374
        %v438 = vpop.f32.mrf.mxu0
        %v439 = vadd.f32 %v269, %v438
        %v440 = vpop.f32.mrf.mxu0
        %v441 = vadd.f32 %v269, %v440
        %442 = vmatmul.bf16.gmra.mxu0 %v377
        %v443 = vpop.f32.mrf.mxu0
        %v444 = vadd.f32 %v269, %v443
        %v445 = vpop.f32.mrf.mxu0
        %v446 = vadd.f32 %v269, %v445
        %447 = vmatmul.bf16.gmra.mxu0 %v380
        %v448 = vpop.f32.mrf.mxu0
        %v449 = vadd.f32 %v269, %v448
        %v450 = vpop.f32.mrf.mxu0
        %v451 = vadd.f32 %v269, %v450
        %452 = vmatmul.bf16.gmra.mxu0 %v383
        %v453 = vpop.f32.mrf.mxu0
        %v454 = vadd.f32 %v269, %v453
        %v455 = vpop.f32.mrf.mxu0
        %v456 = vadd.f32 %v269, %v455
        %457 = vmatmul.bf16.gmra.mxu0 %v386
        %v458 = vpop.f32.mrf.mxu0
        %v459 = vadd.f32 %v269, %v458
        %v460 = vpop.f32.mrf.mxu0
        %v461 = vadd.f32 %v269, %v460
        %462 = vmatmul.bf16.gmra.mxu0 %v389
        %v463 = vpop.f32.mrf.mxu0
        %v464 = vadd.f32 %v269, %v463
        %v465 = vpop.f32.mrf.mxu0
        %v466 = vadd.f32 %v269, %v465
        %467 = vmatmul.bf16.gmra.mxu0 %v392
        %v468 = vpop.f32.mrf.mxu0
        %v469 = vadd.f32 %v269, %v468
        %v470 = vpop.f32.mrf.mxu0
        %v471 = vadd.f32 %v269, %v470
        %472 = vmatmul.bf16.gmra.mxu0 %v395
        %v473 = vpop.f32.mrf.mxu0
        %v474 = vadd.f32 %v269, %v473
        %v475 = vpop.f32.mrf.mxu0
        %v476 = vadd.f32 %v269, %v475
        %477 = vmatmul.bf16.gmra.mxu0 %v398
        %v478 = vpop.f32.mrf.mxu0
        %v479 = vadd.f32 %v269, %v478
        %v480 = vpop.f32.mrf.mxu0
        %v481 = vadd.f32 %v269, %v480
        %482 = vmatmul.bf16.gmra.mxu0 %v401
        %v483 = vpop.f32.mrf.mxu0
        %v484 = vadd.f32 %v269, %v483
        %v485 = vpop.f32.mrf.mxu0
        %v486 = vadd.f32 %v269, %v485
        %487 = vmatmul.bf16.gmra.mxu0 %v404
        %v488 = vpop.f32.mrf.mxu0
        %v489 = vadd.f32 %v269, %v488
        %v490 = vpop.f32.mrf.mxu0
        %v491 = vadd.f32 %v269, %v490
        %492 = vmatmul.bf16.gmra.mxu0 %v407
        %v493 = vpop.f32.mrf.mxu0
        %v494 = vadd.f32 %v269, %v493
        %v495 = vpop.f32.mrf.mxu0
        %v496 = vadd.f32 %v269, %v495
        %497 = vmatmul.bf16.gmra.mxu0 %v410
        %v498 = vpop.f32.mrf.mxu0
        %v499 = vadd.f32 %v269, %v498
        %v500 = vpop.f32.mrf.mxu0
        %v501 = vadd.f32 %v269, %v500
        %502 = vmatmul.bf16.gmra.mxu0 %v413
        %v503 = vpop.f32.mrf.mxu0
        %v504 = vadd.f32 %v269, %v503
        %v505 = vpop.f32.mrf.mxu0
        %v506 = vadd.f32 %v269, %v505
        %507 = vdwg.mxu0
        %v508 = vmax.f32 %v429, 0.0
        %v509 = vmax.f32 %v431, 0.0
        %v510 = vmax.f32 %v434, 0.0
        %v511 = vmax.f32 %v436, 0.0
        %v512 = vmax.f32 %v439, 0.0
        %v513 = vmax.f32 %v441, 0.0
        %v514 = vmax.f32 %v444, 0.0
        %v515 = vmax.f32 %v446, 0.0
        %v516 = vmax.f32 %v449, 0.0
        %v517 = vmax.f32 %v451, 0.0
        %v518 = vmax.f32 %v454, 0.0
        %v519 = vmax.f32 %v456, 0.0
        %v520 = vmax.f32 %v459, 0.0
        %v521 = vmax.f32 %v461, 0.0
        %v522 = vmax.f32 %v464, 0.0
        %v523 = vmax.f32 %v466, 0.0
        %v524 = vmax.f32 %v469, 0.0
        %v525 = vmax.f32 %v471, 0.0
        %v526 = vmax.f32 %v474, 0.0
        %v527 = vmax.f32 %v476, 0.0
        %v528 = vmax.f32 %v479, 0.0
        %v529 = vmax.f32 %v481, 0.0
        %v530 = vmax.f32 %v484, 0.0
        %v531 = vmax.f32 %v486, 0.0
        %v532 = vmax.f32 %v489, 0.0
        %v533 = vmax.f32 %v491, 0.0
        %v534 = vmax.f32 %v494, 0.0
        %v535 = vmax.f32 %v496, 0.0
        %v536 = vmax.f32 %v499, 0.0
        %v537 = vmax.f32 %v501, 0.0
        %v538 = vmax.f32 %v504, 0.0
        %v539 = vmax.f32 %v506, 0.0
        %v540 = vpack.c.bf16 %v508, %v508
        %v541 = vpack.c.bf16 %v509, %v509
        %v542 = vpack.c.bf16 %v510, %v510
        %v543 = vpack.c.bf16 %v511, %v511
        %v544 = vpack.c.bf16 %v512, %v512
        %v545 = vpack.c.bf16 %v513, %v513
        %v546 = vpack.c.bf16 %v514, %v514
        %v547 = vpack.c.bf16 %v515, %v515
        %v548 = vpack.c.bf16 %v516, %v516
        %v549 = vpack.c.bf16 %v517, %v517
        %v550 = vpack.c.bf16 %v518, %v518
        %v551 = vpack.c.bf16 %v519, %v519
        %v552 = vpack.c.bf16 %v520, %v520
        %v553 = vpack.c.bf16 %v521, %v521
        %v554 = vpack.c.bf16 %v522, %v522
        %v555 = vpack.c.bf16 %v523, %v523
        %v556 = vpack.c.bf16 %v524, %v524
        %v557 = vpack.c.bf16 %v525, %v525
        %v558 = vpack.c.bf16 %v526, %v526
        %v559 = vpack.c.bf16 %v527, %v527
        %v560 = vpack.c.bf16 %v528, %v528
        %v561 = vpack.c.bf16 %v529, %v529
        %v562 = vpack.c.bf16 %v530, %v530
        %v563 = vpack.c.bf16 %v531, %v531
        %v564 = vpack.c.bf16 %v532, %v532
        %v565 = vpack.c.bf16 %v533, %v533
        %v566 = vpack.c.bf16 %v534, %v534
        %v567 = vpack.c.bf16 %v535, %v535
        %v568 = vpack.c.bf16 %v536, %v536
        %v569 = vpack.c.bf16 %v537, %v537
        %v570 = vpack.c.bf16 %v538, %v538
        %v571 = vpack.c.bf16 %v539, %v539
        %572 = vst [vmem:[%s226] sm:$0xf] %v540
        %573 = vst [vmem:[%s226 + $0x4] sm:$0xf] %v541
        %574 = vst [vmem:[%s226 + $0x8] sm:$0xf] %v542
        %575 = vst [vmem:[%s226 + $0xc] sm:$0xf] %v543
        %576 = vst [vmem:[%s226 + $0x10] sm:$0xf] %v544
        %577 = vst [vmem:[%s226 + $0x14] sm:$0xf] %v545
        %578 = vst [vmem:[%s226 + $0x18] sm:$0xf] %v546
        %579 = vst [vmem:[%s226 + $0x1c] sm:$0xf] %v547
        %580 = vst [vmem:[%s226 + $0x20] sm:$0xf] %v548
        %581 = vst [vmem:[%s226 + $0x24] sm:$0xf] %v549
        %582 = vst [vmem:[%s226 + $0x28] sm:$0xf] %v550
        %583 = vst [vmem:[%s226 + $0x2c] sm:$0xf] %v551
        %584 = vst [vmem:[%s226 + $0x30] sm:$0xf] %v552
        %585 = vst [vmem:[%s226 + $0x34] sm:$0xf] %v553
        %586 = vst [vmem:[%s226 + $0x38] sm:$0xf] %v554
        %587 = vst [vmem:[%s226 + $0x3c] sm:$0xf] %v555
        %588 = vst [vmem:[%s226 + $0x40] sm:$0xf] %v556
        %589 = vst [vmem:[%s226 + $0x44] sm:$0xf] %v557
        %590 = vst [vmem:[%s226 + $0x48] sm:$0xf] %v558
        %591 = vst [vmem:[%s226 + $0x4c] sm:$0xf] %v559
        %592 = vst [vmem:[%s226 + $0x50] sm:$0xf] %v560
        %593 = vst [vmem:[%s226 + $0x54] sm:$0xf] %v561
        %594 = vst [vmem:[%s226 + $0x58] sm:$0xf] %v562
        %595 = vst [vmem:[%s226 + $0x5c] sm:$0xf] %v563
        %596 = vst [vmem:[%s226 + $0x60] sm:$0xf] %v564
        %597 = vst [vmem:[%s226 + $0x64] sm:$0xf] %v565
        %598 = vst [vmem:[%s226 + $0x68] sm:$0xf] %v566
        %599 = vst [vmem:[%s226 + $0x6c] sm:$0xf] %v567
        %600 = vst [vmem:[%s226 + $0x70] sm:$0xf] %v568
        %601 = vst [vmem:[%s226 + $0x74] sm:$0xf] %v569
        %602 = vst [vmem:[%s226 + $0x78] sm:$0xf] %v570
        %603 = vst [vmem:[%s226 + $0x7c] sm:$0xf] %v571
        %s604 = scalar_lea.vmem %s198, 128 [#allocation2]
        %v605 = vld [vmem:[%s604] sm:$0xf]
        %v606 = vld [vmem:[%s604 + $0x4] sm:$0xf]
        %v607 = vld [vmem:[%s604 + $0x8] sm:$0xf]
        %v608 = vld [vmem:[%s604 + $0xc] sm:$0xf]
        %v609 = vld [vmem:[%s604 + $0x10] sm:$0xf]
        %v610 = vld [vmem:[%s604 + $0x14] sm:$0xf]
        %v611 = vld [vmem:[%s604 + $0x18] sm:$0xf]
        %v612 = vld [vmem:[%s604 + $0x1c] sm:$0xf]
        %v613 = vld [vmem:[%s604 + $0x20] sm:$0xf]
        %v614 = vld [vmem:[%s604 + $0x24] sm:$0xf]
        %v615 = vld [vmem:[%s604 + $0x28] sm:$0xf]
        %v616 = vld [vmem:[%s604 + $0x2c] sm:$0xf]
        %v617 = vld [vmem:[%s604 + $0x30] sm:$0xf]
        %v618 = vld [vmem:[%s604 + $0x34] sm:$0xf]
        %v619 = vld [vmem:[%s604 + $0x38] sm:$0xf]
        %v620 = vld [vmem:[%s604 + $0x3c] sm:$0xf]
        %v621 = vld [vmem:[%s604 + $0x40] sm:$0xf]
        %v622 = vld [vmem:[%s604 + $0x44] sm:$0xf]
        %v623 = vld [vmem:[%s604 + $0x48] sm:$0xf]
        %v624 = vld [vmem:[%s604 + $0x4c] sm:$0xf]
        %v625 = vld [vmem:[%s604 + $0x50] sm:$0xf]
        %v626 = vld [vmem:[%s604 + $0x54] sm:$0xf]
        %v627 = vld [vmem:[%s604 + $0x58] sm:$0xf]
        %v628 = vld [vmem:[%s604 + $0x5c] sm:$0xf]
        %v629 = vld [vmem:[%s604 + $0x60] sm:$0xf]
        %v630 = vld [vmem:[%s604 + $0x64] sm:$0xf]
        %v631 = vld [vmem:[%s604 + $0x68] sm:$0xf]
        %v632 = vld [vmem:[%s604 + $0x6c] sm:$0xf]
        %v633 = vld [vmem:[%s604 + $0x70] sm:$0xf]
        %v634 = vld [vmem:[%s604 + $0x74] sm:$0xf]
        %v635 = vld [vmem:[%s604 + $0x78] sm:$0xf]
        %v636 = vld [vmem:[%s604 + $0x7c] sm:$0xf]
        %v637 = vld [vmem:[#allocation5] sm:$0xf]
        %v638 = vld [vmem:[#allocation5 + $0x4] sm:$0xf]
        %v639 = vld [vmem:[#allocation5 + $0x8] sm:$0xf]
        %v640 = vld [vmem:[#allocation5 + $0xc] sm:$0xf]
        %v641 = vld [vmem:[#allocation5 + $0x10] sm:$0x3]
        %v642 = vld [vmem:[%s2] sm:$0x1]
        %v644 = vperm.slane %v642, 0
        %v678 = vunpack.c.l.b16 %v605
        %v679 = vunpack.c.l.b16 %v606
        %v680 = vunpack.c.l.b16 %v607
        %v681 = vunpack.c.l.b16 %v608
        %v682 = vunpack.c.l.b16 %v609
        %v683 = vunpack.c.l.b16 %v610
        %v684 = vunpack.c.l.b16 %v611
        %v685 = vunpack.c.l.b16 %v612
        %v686 = vunpack.c.l.b16 %v613
        %v687 = vunpack.c.l.b16 %v614
        %v688 = vunpack.c.l.b16 %v615
        %v689 = vunpack.c.l.b16 %v616
        %v690 = vunpack.c.l.b16 %v617
        %v691 = vunpack.c.l.b16 %v618
        %v692 = vunpack.c.l.b16 %v619
        %v693 = vunpack.c.l.b16 %v620
        %v694 = vunpack.c.l.b16 %v621
        %v695 = vunpack.c.l.b16 %v622
        %v696 = vunpack.c.l.b16 %v623
        %v697 = vunpack.c.l.b16 %v624
        %v698 = vunpack.c.l.b16 %v625
        %v699 = vunpack.c.l.b16 %v626
        %v700 = vunpack.c.l.b16 %v627
        %v701 = vunpack.c.l.b16 %v628
        %v702 = vunpack.c.l.b16 %v629
        %v703 = vunpack.c.l.b16 %v630
        %v704 = vunpack.c.l.b16 %v631
        %v705 = vunpack.c.l.b16 %v632
        %v706 = vunpack.c.l.b16 %v633
        %v707 = vunpack.c.l.b16 %v634
        %v708 = vunpack.c.l.b16 %v635
        %v709 = vunpack.c.l.b16 %v636
        %v710 = vpack.c.b16 %v679, %v678
        %v711 = vpack.c.b16 %v681, %v680
        %v712 = vpack.c.b16 %v683, %v682
        %v713 = vpack.c.b16 %v685, %v684
        %v714 = vpack.c.b16 %v687, %v686
        %v715 = vpack.c.b16 %v689, %v688
        %v716 = vpack.c.b16 %v691, %v690
        %v717 = vpack.c.b16 %v693, %v692
        %v718 = vpack.c.b16 %v695, %v694
        %v719 = vpack.c.b16 %v697, %v696
        %v720 = vpack.c.b16 %v699, %v698
        %v721 = vpack.c.b16 %v701, %v700
        %v722 = vpack.c.b16 %v703, %v702
        %v723 = vpack.c.b16 %v705, %v704
        %v724 = vpack.c.b16 %v707, %v706
        %v725 = vpack.c.b16 %v709, %v708
        %v731 = vunpack.c.l.b16 %v637
        %v732 = vunpack.c.l.b16 %v638
        %v733 = vunpack.c.l.b16 %v639
        %v734 = vunpack.c.l.b16 %v640
        %v735 = vunpack.c.l.b16 %v641
        %v736 = vpack.c.b16 %v732, %v731
        %v737 = vpack.c.b16 %v734, %v733
        %v738 = vpack.c.b16 %v735, %v735
        %v742 = vsel %vm366, %v710, 0
        %v745 = vsel %vm366, %v711, 0
        %v748 = vsel %vm366, %v712, 0
        %v751 = vsel %vm366, %v713, 0
        %v754 = vsel %vm366, %v714, 0
        %v757 = vsel %vm366, %v715, 0
        %v760 = vsel %vm366, %v716, 0
        %v763 = vsel %vm366, %v717, 0
        %v766 = vsel %vm366, %v718, 0
        %v769 = vsel %vm366, %v719, 0
        %v772 = vsel %vm366, %v720, 0
        %v775 = vsel %vm366, %v721, 0
        %v778 = vsel %vm366, %v722, 0
        %v781 = vsel %vm366, %v723, 0
        %v784 = vsel %vm366, %v724, 0
        %v787 = vsel %vm366, %v725, 0
        %v790 = vsel %vm415, %v738, 0
        %792 = vmatpush.bf16.msra.mxu0 0
        %793 = vmatpush.bf16.msra.mxu0 0
        %794 = vmatpush.bf16.msra.mxu0 0
        %795 = vmatpush.bf16.msra.mxu0 0
        %796 = vmatpush.bf16.msra.mxu0 0
        %797 = vmatpush.bf16.msra.mxu0 %v790
        %798 = vmatpush.bf16.msra.mxu0 %v737
        %799 = vmatpush.bf16.msra.mxu0 %v736
        %800 = vmatmul.bf16.gmra.mxu0 %v742
        %v801 = vpop.f32.mrf.mxu0
        %v802 = vadd.f32 %v644, %v801
        %v803 = vpop.f32.mrf.mxu0
        %v804 = vadd.f32 %v644, %v803
        %805 = vmatmul.bf16.gmra.mxu0 %v745
        %v806 = vpop.f32.mrf.mxu0
        %v807 = vadd.f32 %v644, %v806
        %v808 = vpop.f32.mrf.mxu0
        %v809 = vadd.f32 %v644, %v808
        %810 = vmatmul.bf16.gmra.mxu0 %v748
        %v811 = vpop.f32.mrf.mxu0
        %v812 = vadd.f32 %v644, %v811
        %v813 = vpop.f32.mrf.mxu0
        %v814 = vadd.f32 %v644, %v813
        %815 = vmatmul.bf16.gmra.mxu0 %v751
        %v816 = vpop.f32.mrf.mxu0
        %v817 = vadd.f32 %v644, %v816
        %v818 = vpop.f32.mrf.mxu0
        %v819 = vadd.f32 %v644, %v818
        %820 = vmatmul.bf16.gmra.mxu0 %v754
        %v821 = vpop.f32.mrf.mxu0
        %v822 = vadd.f32 %v644, %v821
        %v823 = vpop.f32.mrf.mxu0
        %v824 = vadd.f32 %v644, %v823
        %825 = vmatmul.bf16.gmra.mxu0 %v757
        %v826 = vpop.f32.mrf.mxu0
        %v827 = vadd.f32 %v644, %v826
        %v828 = vpop.f32.mrf.mxu0
        %v829 = vadd.f32 %v644, %v828
        %830 = vmatmul.bf16.gmra.mxu0 %v760
        %v831 = vpop.f32.mrf.mxu0
        %v832 = vadd.f32 %v644, %v831
        %v833 = vpop.f32.mrf.mxu0
        %v834 = vadd.f32 %v644, %v833
        %835 = vmatmul.bf16.gmra.mxu0 %v763
        %v836 = vpop.f32.mrf.mxu0
        %v837 = vadd.f32 %v644, %v836
        %v838 = vpop.f32.mrf.mxu0
        %v839 = vadd.f32 %v644, %v838
        %840 = vmatmul.bf16.gmra.mxu0 %v766
        %v841 = vpop.f32.mrf.mxu0
        %v842 = vadd.f32 %v644, %v841
        %v843 = vpop.f32.mrf.mxu0
        %v844 = vadd.f32 %v644, %v843
        %845 = vmatmul.bf16.gmra.mxu0 %v769
        %v846 = vpop.f32.mrf.mxu0
        %v847 = vadd.f32 %v644, %v846
        %v848 = vpop.f32.mrf.mxu0
        %v849 = vadd.f32 %v644, %v848
        %850 = vmatmul.bf16.gmra.mxu0 %v772
        %v851 = vpop.f32.mrf.mxu0
        %v852 = vadd.f32 %v644, %v851
        %v853 = vpop.f32.mrf.mxu0
        %v854 = vadd.f32 %v644, %v853
        %855 = vmatmul.bf16.gmra.mxu0 %v775
        %v856 = vpop.f32.mrf.mxu0
        %v857 = vadd.f32 %v644, %v856
        %v858 = vpop.f32.mrf.mxu0
        %v859 = vadd.f32 %v644, %v858
        %860 = vmatmul.bf16.gmra.mxu0 %v778
        %v861 = vpop.f32.mrf.mxu0
        %v862 = vadd.f32 %v644, %v861
        %v863 = vpop.f32.mrf.mxu0
        %v864 = vadd.f32 %v644, %v863
        %865 = vmatmul.bf16.gmra.mxu0 %v781
        %v866 = vpop.f32.mrf.mxu0
        %v867 = vadd.f32 %v644, %v866
        %v868 = vpop.f32.mrf.mxu0
        %v869 = vadd.f32 %v644, %v868
        %870 = vmatmul.bf16.gmra.mxu0 %v784
        %v871 = vpop.f32.mrf.mxu0
        %v872 = vadd.f32 %v644, %v871
        %v873 = vpop.f32.mrf.mxu0
        %v874 = vadd.f32 %v644, %v873
        %875 = vmatmul.bf16.gmra.mxu0 %v787
        %v876 = vpop.f32.mrf.mxu0
        %v877 = vadd.f32 %v644, %v876
        %v878 = vpop.f32.mrf.mxu0
        %v879 = vadd.f32 %v644, %v878
        %880 = vdwg.mxu0
        %v881 = vmax.f32 %v802, 0.0
        %v882 = vmax.f32 %v804, 0.0
        %v883 = vmax.f32 %v807, 0.0
        %v884 = vmax.f32 %v809, 0.0
        %v885 = vmax.f32 %v812, 0.0
        %v886 = vmax.f32 %v814, 0.0
        %v887 = vmax.f32 %v817, 0.0
        %v888 = vmax.f32 %v819, 0.0
        %v889 = vmax.f32 %v822, 0.0
        %v890 = vmax.f32 %v824, 0.0
        %v891 = vmax.f32 %v827, 0.0
        %v892 = vmax.f32 %v829, 0.0
        %v893 = vmax.f32 %v832, 0.0
        %v894 = vmax.f32 %v834, 0.0
        %v895 = vmax.f32 %v837, 0.0
        %v896 = vmax.f32 %v839, 0.0
        %v897 = vmax.f32 %v842, 0.0
        %v898 = vmax.f32 %v844, 0.0
        %v899 = vmax.f32 %v847, 0.0
        %v900 = vmax.f32 %v849, 0.0
        %v901 = vmax.f32 %v852, 0.0
        %v902 = vmax.f32 %v854, 0.0
        %v903 = vmax.f32 %v857, 0.0
        %v904 = vmax.f32 %v859, 0.0
        %v905 = vmax.f32 %v862, 0.0
        %v906 = vmax.f32 %v864, 0.0
        %v907 = vmax.f32 %v867, 0.0
        %v908 = vmax.f32 %v869, 0.0
        %v909 = vmax.f32 %v872, 0.0
        %v910 = vmax.f32 %v874, 0.0
        %v911 = vmax.f32 %v877, 0.0
        %v912 = vmax.f32 %v879, 0.0
        %v913 = vpack.c.bf16 %v881, %v881
        %v914 = vpack.c.bf16 %v882, %v882
        %v915 = vpack.c.bf16 %v883, %v883
        %v916 = vpack.c.bf16 %v884, %v884
        %v917 = vpack.c.bf16 %v885, %v885
        %v918 = vpack.c.bf16 %v886, %v886
        %v919 = vpack.c.bf16 %v887, %v887
        %v920 = vpack.c.bf16 %v888, %v888
        %v921 = vpack.c.bf16 %v889, %v889
        %v922 = vpack.c.bf16 %v890, %v890
        %v923 = vpack.c.bf16 %v891, %v891
        %v924 = vpack.c.bf16 %v892, %v892
        %v925 = vpack.c.bf16 %v893, %v893
        %v926 = vpack.c.bf16 %v894, %v894
        %v927 = vpack.c.bf16 %v895, %v895
        %v928 = vpack.c.bf16 %v896, %v896
        %v929 = vpack.c.bf16 %v897, %v897
        %v930 = vpack.c.bf16 %v898, %v898
        %v931 = vpack.c.bf16 %v899, %v899
        %v932 = vpack.c.bf16 %v900, %v900
        %v933 = vpack.c.bf16 %v901, %v901
        %v934 = vpack.c.bf16 %v902, %v902
        %v935 = vpack.c.bf16 %v903, %v903
        %v936 = vpack.c.bf16 %v904, %v904
        %v937 = vpack.c.bf16 %v905, %v905
        %v938 = vpack.c.bf16 %v906, %v906
        %v939 = vpack.c.bf16 %v907, %v907
        %v940 = vpack.c.bf16 %v908, %v908
        %v941 = vpack.c.bf16 %v909, %v909
        %v942 = vpack.c.bf16 %v910, %v910
        %v943 = vpack.c.bf16 %v911, %v911
        %v944 = vpack.c.bf16 %v912, %v912
        %s945 = scalar_lea.vmem %s226, 128 [#allocation7]
        %946 = vst [vmem:[%s945] sm:$0xf] %v913
        %947 = vst [vmem:[%s945 + $0x4] sm:$0xf] %v914
        %948 = vst [vmem:[%s945 + $0x8] sm:$0xf] %v915
        %949 = vst [vmem:[%s945 + $0xc] sm:$0xf] %v916
        %950 = vst [vmem:[%s945 + $0x10] sm:$0xf] %v917
        %951 = vst [vmem:[%s945 + $0x14] sm:$0xf] %v918
        %952 = vst [vmem:[%s945 + $0x18] sm:$0xf] %v919
        %953 = vst [vmem:[%s945 + $0x1c] sm:$0xf] %v920
        %954 = vst [vmem:[%s945 + $0x20] sm:$0xf] %v921
        %955 = vst [vmem:[%s945 + $0x24] sm:$0xf] %v922
        %956 = vst [vmem:[%s945 + $0x28] sm:$0xf] %v923
        %957 = vst [vmem:[%s945 + $0x2c] sm:$0xf] %v924
        %958 = vst [vmem:[%s945 + $0x30] sm:$0xf] %v925
        %959 = vst [vmem:[%s945 + $0x34] sm:$0xf] %v926
        %960 = vst [vmem:[%s945 + $0x38] sm:$0xf] %v927
        %961 = vst [vmem:[%s945 + $0x3c] sm:$0xf] %v928
        %962 = vst [vmem:[%s945 + $0x40] sm:$0xf] %v929
        %963 = vst [vmem:[%s945 + $0x44] sm:$0xf] %v930
        %964 = vst [vmem:[%s945 + $0x48] sm:$0xf] %v931
        %965 = vst [vmem:[%s945 + $0x4c] sm:$0xf] %v932
        %966 = vst [vmem:[%s945 + $0x50] sm:$0xf] %v933
        %967 = vst [vmem:[%s945 + $0x54] sm:$0xf] %v934
        %968 = vst [vmem:[%s945 + $0x58] sm:$0xf] %v935
        %969 = vst [vmem:[%s945 + $0x5c] sm:$0xf] %v936
        %970 = vst [vmem:[%s945 + $0x60] sm:$0xf] %v937
        %971 = vst [vmem:[%s945 + $0x64] sm:$0xf] %v938
        %972 = vst [vmem:[%s945 + $0x68] sm:$0xf] %v939
        %973 = vst [vmem:[%s945 + $0x6c] sm:$0xf] %v940
        %974 = vst [vmem:[%s945 + $0x70] sm:$0xf] %v941
        %975 = vst [vmem:[%s945 + $0x74] sm:$0xf] %v942
        %976 = vst [vmem:[%s945 + $0x78] sm:$0xf] %v943
        %977 = vst [vmem:[%s945 + $0x7c] sm:$0xf] %v944
        %s978 = sand.u32 %s113, 1
        %s979 = scalar_lea.sflag [#allocation4], %s978
        %s980 = sand.u32 %s113, 1
        %s981 = smul.addr %s980, 256
        %s982 = scalar_lea.vmem [#allocation7], %s981
        // Predicated region
        $region41: #{tpu_custom_call.1} parent=31 // pred_check
          %p983 = pneg %p123
        $region42: #{tpu_custom_call.1} parent=31 // pred_check_branch
          %985 = sbr.rel (%p983) target = $region44
        $region43: #{tpu_custom_call.1} parent=31 // pred_region
          %s986 = smul.u32 16, %s26
          %988 = vsyncadd %s979, 0
          %s989 = smul.addr %s986, 4
          %s990 = smul.addr %s25, 128
          %s991 = sadd.s32 %s989, %s990
          %s992 = smul.addr %s991, 4
          %s993 = scalar_lea.hbm %s3, %s992
          %s994 = sshll.u32 %s982, 4
          %s995 = int_to_ptr.vmem [resolvable:$true] %s994
          %s996 = sshll.u32 %s993, 4
          %s997 = int_to_ptr.hbm [resolvable:$true] %s996
          %1002 = dma.vmem_to_hbm [thread:$0]  %s995, 4096, %s997, %s979, 64, 64, 4
        $region44: #{tpu_custom_call.1} parent=31 // pred_fallthru
          _
      $region32: #{tpu_custom_call.1} parent=5 // pred_fallthru
        _
      %p1003 = scmp.le.s32.totalorder 2, %s16
      // Predicated region
      $region45: #{tpu_custom_call.1} parent=5 // pred_check
        %p1004 = pneg %p1003
      $region46: #{tpu_custom_call.1} parent=5 // pred_check_branch
        %1006 = sbr.rel (%p1004) target = $region48
      $region47: #{tpu_custom_call.1} parent=5 // pred_region
        %s1007 = ssub.s32 %s16, 2
        // Predicated region
        $region49: #{tpu_custom_call.1} parent=47 // pred_check
          %p1008 = pneg %p129
        $region50: #{tpu_custom_call.1} parent=47 // pred_check_branch
          %1010 = sbr.rel (%p1008) target = $region52
        $region51: #{tpu_custom_call.1} parent=47 // pred_region
          %s1011 = sand.u32 %s114, 1
          %s1012 = scalar_lea.sflag [#allocation4], %s1011
          %s1013 = sand.u32 %s114, 1
          %s1014 = smul.addr %s1013, 256
          %s1015 = scalar_lea.vmem [#allocation7], %s1014
          %1017 = dma.done %s1012, 4096
        $region52: #{tpu_custom_call.1} parent=47 // pred_fallthru
          _
      $region48: #{tpu_custom_call.1} parent=5 // pred_fallthru
        _
    $region6: #{tpu_custom_call.1} parent=1 // loop_footer
      %s20 = sadd.s32 1, %s16
    $region7: #{tpu_custom_call.1} parent=1 // loop_footer_branch
      %15 = sbr.rel target = $region3
    $region8: #{tpu_custom_call.1} parent=1 // loop_exit
      _
    %1018 = vsyncpa [#allocation3], 1
    %s1019 = scalar_lea.sflag [#allocation3], 1
    %1020 = vsyncpa %s1019, 1
    %1021 = vsyncpa [#allocation6], 1
    %1022 = vsyncpa [#allocation4], 1
    %s1023 = scalar_lea.sflag [#allocation4], 1
    %1024 = vsyncpa %s1023, 1

</llo_original>
